<compile_context>
chip_gen: v6e
topology: v6e:2x2x1
jax: 0.10.0
libtpu: 0.0.40
codegen_flags: <defaults>
</compile_context>

<pallas_src>
import functools

import jax
import jax.numpy as jnp
from jax import lax
from jax.experimental import pallas as pl
from jax.experimental.pallas import tpu as pltpu

LANES = 128
MAX_TILE_ROWS = 4096           # 4096 * 128 * 4B = 2 MiB per f32 input block
NUM_CORES = 2                  # leading "parallel" axis; sharded on v7x, free elsewhere
VMEM_LIMIT_BYTES = 32 * 1024 * 1024


def _rmse_partial_kernel(n_blocks_total, blocks_per_core, tile_rows, acc_rows,
                         valid_rows, x_ref, y_ref, out_ref):
    """Accumulate per-core partial sums of (x - y)^2 into a small VMEM block."""
    c = pl.program_id(0)              # core / parallel axis
    j = pl.program_id(1)              # reduction axis (this core's block stream)
    b = c * blocks_per_core + j       # linear block id (may exceed n_blocks_total-1)

    n_groups = tile_rows // acc_rows
    full_blocks = valid_rows // tile_rows     # Python int: blocks with no padded rows

    @pl.when(j == 0)
    def _init():
        out_ref[...] = jnp.zeros_like(out_ref)

    def _accumulate(masked):
        d = x_ref[...].astype(jnp.float32) - y_ref[...].astype(jnp.float32)
        sq = d * d
        if masked:
            # Zero the Pallas-padded (unspecified) rows of the boundary block.
            row_ids = full_blocks * tile_rows + lax.broadcasted_iota(
                jnp.int32, (tile_rows, 1), 0)
            sq = jnp.where(row_ids < valid_rows, sq, 0.0)
        # Tile-aligned reshape (rows split at a multiple of 8 -> free) and
        # axis-0 sum: folds the whole block into acc_rows x 128 partials.
        out_ref[...] += jnp.sum(sq.reshape(n_groups, acc_rows, LANES), axis=0)

    @pl.when(b < full_blocks)
    def _full_block():
        _accumulate(masked=False)

    if full_blocks < n_blocks_total:          # static: a ragged last block exists
        @pl.when(b == full_blocks)
        def _ragged_block():
            _accumulate(masked=True)
    # Blocks with b >= n_blocks_total are clamped duplicates (uneven 2-core
    # split); they fall through with no accumulation.


def rmse_loss(x: jax.Array, y: jax.Array) -> jax.Array:
    assert x.shape == y.shape, (
        f"loss input shape error, input {x.shape} | target {y.shape} !"
    )
    n_elems = x.size
    assert n_elems > 0, "RMSELoss requires a non-empty input"

    # Flatten in original dtype (contiguous reshape is free; cast is in-kernel).
    xf = x.reshape(-1)
    yf = y.reshape(-1)

    # Rare fallback: lane-align with a zero pad (<128 elems of pad, but a full
    # copy of the inputs).  Zeros add 0 to the squared-diff sum; we still
    # divide by the original n_elems.  See TODO(synk) at top of file.
    rem = n_elems % LANES
    if rem:
        pad = LANES - rem
        xf = jnp.pad(xf, (0, pad))
        yf = jnp.pad(yf, (0, pad))

    rows = xf.shape[0] // LANES
    x2d = xf.reshape(rows, LANES)
    y2d = yf.reshape(rows, LANES)

    # Block sizing: biggest block that fits the VMEM budget; exact fit for
    # small inputs (full-dim block is exempt from the (8,128) rule).
    tile_rows = rows if rows <= MAX_TILE_ROWS else MAX_TILE_ROWS
    n_blocks_total = pl.cdiv(rows, tile_rows)

    # 2-way core split only when there are >= 2 blocks to share.
    num_cores = NUM_CORES if n_blocks_total >= NUM_CORES else 1
    blocks_per_core = pl.cdiv(n_blocks_total, num_cores)

    # Per-core partial-sum block size (multiple of 8 sublanes when possible).
    if tile_rows % 64 == 0:
        acc_rows = 64
    elif tile_rows % 8 == 0:
        acc_rows = 8
    else:
        acc_rows = tile_rows          # tiny single-block inputs only

    kernel = functools.partial(
        _rmse_partial_kernel, n_blocks_total, blocks_per_core, tile_rows,
        acc_rows, rows)

    if num_cores * blocks_per_core == n_blocks_total:
        def in_map(c, j):                         # even split: no clamp needed
            return (c * blocks_per_core + j, 0)
    else:
        def in_map(c, j):                         # clamp trailing duplicate blocks
            return (jnp.minimum(c * blocks_per_core + j, n_blocks_total - 1), 0)

    partials = pl.pallas_call(
        kernel,
        out_shape=jax.ShapeDtypeStruct((num_cores * acc_rows, LANES),
                                       jnp.float32),
        grid_spec=pl.GridSpec(
            grid=(num_cores, blocks_per_core),
            in_specs=[
                pl.BlockSpec((tile_rows, LANES), in_map),
                pl.BlockSpec((tile_rows, LANES), in_map),
            ],
            # Each core owns its own partial-sum block; resident across j.
            out_specs=pl.BlockSpec((acc_rows, LANES), lambda c, j: (c, 0)),
        ),
        compiler_params=pltpu.CompilerParams(
            dimension_semantics=("parallel", "arbitrary"),
            vmem_limit_bytes=VMEM_LIMIT_BYTES,
        ),
    )(x2d, y2d)

    # Tiny finalize in the wrapper: cross-core/cross-lane add, /n, sqrt.
    total = jnp.sum(partials)
    return jnp.sqrt(total / n_elems).astype(x.dtype)


if __name__ == "__main__":
    key = jax.random.PRNGKey(0)
    rmse = jax.jit(rmse_loss)

    # Small NCHW test (same convention as the PyTorch module).
    k1, k2, k3, k4 = jax.random.split(key, 4)
    shape = (2, 4, 16, 16)
    x = jax.random.normal(k1, shape, dtype=jnp.float32)
    y = jax.random.normal(k2, shape, dtype=jnp.float32)
    loss = jax.block_until_ready(rmse(x, y))
    ref = jnp.sqrt(jnp.mean((x - y) ** 2))
    assert jnp.allclose(loss, ref, rtol=1e-4, atol=1e-6), (loss, ref)

    # Larger test exercising the multi-block, dual-core, ragged-last-block path.
    shape2 = (9001, 128)
    x2 = jax.random.normal(k3, shape2, dtype=jnp.float32)
    y2 = jax.random.normal(k4, shape2, dtype=jnp.float32)
    loss2 = jax.block_until_ready(rmse(x2, y2))
    ref2 = jnp.sqrt(jnp.mean((x2 - y2) ** 2))
    assert jnp.allclose(loss2, ref2, rtol=1e-4, atol=1e-6), (loss2, ref2)

    print("KERNEL_OK")
</pallas_src>

<mosaic_0001>
module attributes {stable_mosaic.version = 11 : i64} {
  func.func @_rmse_partial_kernel(%arg0: i32, %arg1: i32, %arg2: memref<16x128xf32, #tpu.memory_space<vmem>>, %arg3: memref<16x128xf32, #tpu.memory_space<vmem>>, %arg4: memref<8x128xf32, #tpu.memory_space<vmem>>) attributes {dimension_semantics = [#tpu.dimension_semantics<parallel>, #tpu.dimension_semantics<arbitrary>], iteration_bounds = array<i64: 1, 1>, scalar_prefetch = 0 : i64, scratch_operands = 0 : i64, tpu.core_type = #tpu.core_type<tc>, window_params = [{transform_indices = @transform_0, window_bounds = array<i64: 16, 128>}, {transform_indices = @transform_1, window_bounds = array<i64: 16, 128>}, {transform_indices = @transform_2, window_bounds = array<i64: 8, 128>}]} {
    %c1_i32 = arith.constant 1 : i32
    %0 = arith.muli %arg0, %c1_i32 : i32
    %1 = arith.addi %0, %arg1 : i32
    %c0_i32 = arith.constant 0 : i32
    %2 = arith.cmpi eq, %arg1, %c0_i32 : i32
    %3 = arith.extui %2 : i1 to i32
    %c0_i32_0 = arith.constant 0 : i32
    %4 = arith.cmpi ne, %3, %c0_i32_0 : i32
    scf.if %4 {
      %cst = arith.constant 0.000000e+00 : f32
      %8 = vector.broadcast %cst : f32 to vector<8x128xf32>
      %c0 = arith.constant 0 : index
      %c0_3 = arith.constant 0 : index
      %9 = vector.load %arg4[%c0, %c0_3] : memref<8x128xf32, #tpu.memory_space<vmem>>, vector<8x128xf32>
      tpu.vector_store %arg4[%c0, %c0_3], %8 {strides = array<i32>} : memref<8x128xf32, #tpu.memory_space<vmem>>, vector<8x128xf32>,
    } else {
    }
    %c1_i32_1 = arith.constant 1 : i32
    %5 = arith.cmpi slt, %1, %c1_i32_1 : i32
    %6 = arith.extui %5 : i1 to i32
    %c0_i32_2 = arith.constant 0 : i32
    %7 = arith.cmpi ne, %6, %c0_i32_2 : i32
    scf.if %7 {
      %c0 = arith.constant 0 : index
      %c0_3 = arith.constant 0 : index
      %8 = vector.load %arg2[%c0, %c0_3] : memref<16x128xf32, #tpu.memory_space<vmem>>, vector<16x128xf32>
      %c0_4 = arith.constant 0 : index
      %c0_5 = arith.constant 0 : index
      %9 = vector.load %arg3[%c0_4, %c0_5] : memref<16x128xf32, #tpu.memory_space<vmem>>, vector<16x128xf32>
      %10 = arith.subf %8, %9 : vector<16x128xf32>
      %11 = arith.mulf %10, %10 : vector<16x128xf32>
      %c0_6 = arith.constant 0 : index
      %c0_7 = arith.constant 0 : index
      %12 = vector.load %arg4[%c0_6, %c0_7] : memref<8x128xf32, #tpu.memory_space<vmem>>, vector<8x128xf32>
      %13 = vector.shape_cast %11 : vector<16x128xf32> to vector<2x8x128xf32>
      %cst = arith.constant dense<0.000000e+00> : vector<8x128xf32>
      %14 = vector.multi_reduction <add>, %13, %cst [0] : vector<2x8x128xf32> to vector<8x128xf32>
      %15 = arith.addf %12, %14 : vector<8x128xf32>
      %c0_8 = arith.constant 0 : index
      %c0_9 = arith.constant 0 : index
      %16 = vector.load %arg4[%c0_8, %c0_9] : memref<8x128xf32, #tpu.memory_space<vmem>>, vector<8x128xf32>
      tpu.vector_store %arg4[%c0_8, %c0_9], %15 {strides = array<i32>} : memref<8x128xf32, #tpu.memory_space<vmem>>, vector<8x128xf32>,
    } else {
    }
    return
  }
  func.func @transform_0(%arg0: i32, %arg1: i32) -> (i32, i32) {
    %c1_i32 = arith.constant 1 : i32
    %0 = arith.muli %arg0, %c1_i32 : i32
    %1 = arith.addi %0, %arg1 : i32
    %c0_i32 = arith.constant 0 : i32
    %c0_i32_0 = arith.constant 0 : i32
    return %1, %c0_i32 : i32, i32
  }
  func.func @transform_1(%arg0: i32, %arg1: i32) -> (i32, i32) {
    %c1_i32 = arith.constant 1 : i32
    %0 = arith.muli %arg0, %c1_i32 : i32
    %1 = arith.addi %0, %arg1 : i32
    %c0_i32 = arith.constant 0 : i32
    %c0_i32_0 = arith.constant 0 : i32
    return %1, %c0_i32 : i32, i32
  }
  func.func @transform_2(%arg0: i32, %arg1: i32) -> (i32, i32) {
    %c0_i32 = arith.constant 0 : i32
    %c0_i32_0 = arith.constant 0 : i32
    return %arg0, %c0_i32 : i32, i32
  }
}

</mosaic_0001>

<llo_original>
// kernel: rmse_loss.1
$region0: #{rmse_loss.1}
  #allocation0 [shape = 'u32[]', space=smem, size = 0x4, offset = 0x4, fixed_abs, tag = 'smem constant byte address 0x4 - core index']
  #allocation1 [shape = 'u32[144,128]{1,0:T(1,128)}', space=vmem, size = 0x12000, scoped, tag = 'internal scratch']
  %s0 = inlined_call_operand.vmem [shape: f32[16,128], index: 0, kind: input, shape index: {}]
  %s1 = inlined_call_operand.vmem [shape: f32[16,128], index: 1, kind: input, shape index: {}]
  %s2 = inlined_call_operand.vmem [shape: f32[8,128], index: 2, kind: output, shape index: {}]
  %s3 = sld [smem:[#allocation0]]
  $region26: #{rmse_loss.1} parent=0
    _
  %s5 = ssub.s32 1, %s3
  %s6 = scalar_select 0, %s5, %s3
  // Predicated region
  $region2: #{rmse_loss.1} parent=0 // pred_check
    _
  $region3: #{rmse_loss.1} parent=0 // pred_check_branch
    %8 = sbr.rel (0) target = $region5
  $region4: #{rmse_loss.1} parent=0 // pred_region
    %s9 = sadd.s32 0, 0
    %s10 = smul.u32 2, %s9
    %p11 = scmp.lt.s32.totalorder %s10, 1
    %s12 = scalar_select %p11, %s10, 1
    %s13 = smul.addr %s12, 8
    %s14 = scalar_lea.vmem %s0, %s13
    %s15 = sadd.s32 0, 0
    %s16 = smul.u32 2, %s15
  $region5: #{rmse_loss.1} parent=0 // pred_fallthru
    _
  // Predicated region
  $region6: #{rmse_loss.1} parent=0 // pred_check
    _
  $region7: #{rmse_loss.1} parent=0 // pred_check_branch
    %18 = sbr.rel (0) target = $region9
  $region8: #{rmse_loss.1} parent=0 // pred_region
    %s19 = sadd.s32 0, 0
    %s20 = smul.u32 2, %s19
    %p21 = scmp.lt.s32.totalorder %s20, 1
    %s22 = scalar_select %p21, %s20, 1
    %s23 = smul.addr %s22, 8
    %s24 = scalar_lea.vmem %s1, %s23
    %s25 = sadd.s32 0, 0
    %s26 = smul.u32 2, %s25
  $region9: #{rmse_loss.1} parent=0 // pred_fallthru
    _
  %s27 = sadd.s32 0, 0
  %s28 = smul.u32 2, %s27
  %p29 = scmp.lt.s32.totalorder %s28, 1
  %s30 = scalar_select %p29, %s28, 1
  %s31 = smul.addr %s30, 8
  %s32 = scalar_lea.vmem %s0, %s31
  %s33 = sadd.s32 0, 0
  %s34 = smul.u32 2, %s33
  %p35 = scmp.lt.s32.totalorder %s34, 1
  %s36 = scalar_select %p35, %s34, 1
  %s37 = smul.addr %s36, 8
  %s38 = scalar_lea.vmem %s1, %s37
  %s39 = sadd.s32 0, 0
  %s40 = smul.u32 2, %s39
  %p41 = scmp.lt.s32.totalorder %s40, 1
  %s42 = scalar_select %p41, %s40, 1
  %s43 = smul.addr %s42, 8
  %s44 = scalar_lea.vmem %s0, %s43
  %s45 = sadd.s32 0, 0
  %s46 = smul.u32 2, %s45
  %s47 = sadd.s32 0, 0
  %s48 = smul.u32 2, %s47
  %p49 = scmp.lt.s32.totalorder %s48, 1
  %s50 = scalar_select %p49, %s48, 1
  %s51 = smul.addr %s50, 8
  %s52 = scalar_lea.vmem %s1, %s51
  %s53 = sadd.s32 0, 0
  %s54 = smul.u32 2, %s53
  %s55 = sadd.s32 0, 0
  %p56 = scmp.eq.s32.totalorder 0, 0
  // Predicated region
  $region10: #{rmse_loss.1} parent=0 // pred_check
    %p57 = pneg %p56
  $region11: #{rmse_loss.1} parent=0 // pred_check_branch
    %59 = sbr.rel (%p57) target = $region13
  $region12: #{rmse_loss.1} parent=0 // pred_region
    %60 = vst [vmem:[%s2] sm:$0xff] 0.0
  $region13: #{rmse_loss.1} parent=0 // pred_fallthru
    _
  %p61 = scmp.lt.s32.totalorder %s55, 1
  // Predicated region
  $region14: #{rmse_loss.1} parent=0 // pred_check
    %p62 = pneg %p61
  $region15: #{rmse_loss.1} parent=0 // pred_check_branch
    %64 = sbr.rel (%p62) target = $region17
  $region16: #{rmse_loss.1} parent=0 // pred_region
    %v65 = vld [vmem:[%s44] sm:$0xff]
    %v66 = vld [vmem:[%s44 + $0x8] sm:$0xff]
    %v67 = vld [vmem:[%s52] sm:$0xff]
    %v68 = vld [vmem:[%s52 + $0x8] sm:$0xff]
    %v69 = vsub.f32 %v65, %v67
    %v70 = vsub.f32 %v66, %v68
    %v71 = vmul.f32 %v69, %v69
    %v72 = vmul.f32 %v70, %v70
    %v73 = vld [vmem:[%s2] sm:$0xff]
    %v74 = vadd.f32 %v71, %v72
    %v75 = vadd.f32 %v73, %v74
    %76 = vst [vmem:[%s2] sm:$0xff] %v75
  $region17: #{rmse_loss.1} parent=0 // pred_fallthru
    _
  // Predicated region
  $region18: #{rmse_loss.1} parent=0 // pred_check
    _
  $region19: #{rmse_loss.1} parent=0 // pred_check_branch
    %78 = sbr.rel (0) target = $region21
  $region20: #{rmse_loss.1} parent=0 // pred_region
    _
  $region21: #{rmse_loss.1} parent=0 // pred_fallthru
    _
  // Predicated region
  $region22: #{rmse_loss.1} parent=0 // pred_check
    _
  $region23: #{rmse_loss.1} parent=0 // pred_check_branch
    %80 = sbr.rel (0) target = $region25
  $region24: #{rmse_loss.1} parent=0 // pred_region
    _
  $region25: #{rmse_loss.1} parent=0 // pred_fallthru
    _

</llo_original>
